<compile_context>
chip_gen: v7x
topology: tpu7x:2x2x1
jax: 0.10.0
libtpu: 0.0.40
codegen_flags: <defaults>
</compile_context>

<pallas_src>
import math

import jax
import jax.numpy as jnp
from jax import lax
from jax.experimental import pallas as pl
from jax.experimental.pallas import tpu as pltpu


def _rotary_packed_kernel(t_ref, w_ref, o_ref):
    """k positions per output row, expanded via a block-diagonal matmul.

    t_ref: VMEM (tile_r, k)      f32  raw positions (scale folded into W)
    w_ref: VMEM (k, k*dim)       f32  W[j, j*dim + d] = inv_full[d]
    o_ref: VMEM (tile_r, k*dim)  out_dtype

    Exactly one nonzero contraction term per output element -> identical to
    the broadcasted elementwise product.  Precision.HIGHEST is REQUIRED for
    exactness (DEFAULT rounds the f32 operands toward bf16 on the MXU); the
    extra f32-emulation MXU passes are fully hidden under the HBM-write
    roofline, so there is no perf reason to lower the precision.
    """
    o_ref[...] = jnp.dot(
        t_ref[...],
        w_ref[...],
        precision=lax.Precision.HIGHEST,
        preferred_element_type=jnp.float32,
    ).astype(o_ref.dtype)


def rotary_embedding(coordinates, inv_freq, scale=1.0, *,
                     out_dtype=jnp.float32,
                     target_tile_bytes=3 * 1024 * 1024):
    """coordinates (..., i), inv_freq (dim//2,) -> (..., i, dim)."""
    coords = jnp.asarray(coordinates, dtype=jnp.float32)
    inv_freq = jnp.asarray(inv_freq, dtype=jnp.float32)
    orig_shape = coords.shape
    half = inv_freq.shape[0]
    dim = 2 * half
    n = coords.size
    out_itemsize = jnp.dtype(out_dtype).itemsize

    # Hoist the duplication (cat) and the scalar scale onto a tiny (dim,) vector.
    inv_full = jnp.concatenate([inv_freq, inv_freq]) * jnp.asarray(scale, jnp.float32)

    # Lane packing factor: smallest k with (k*dim) % 128 == 0, then widened so
    # each output row is >= ~512 lanes (contraction capped at 128).
    k = 128 // math.gcd(dim, 128)
    while k * dim < 512 and 2 * k <= 128:
        k *= 2
    width = k * dim

    # Pad the flattened position axis so rows is sublane-aligned (multiple of 8)
    # instead of falling back to a masked-store narrow output; padded rows are
    # sliced off at the end.
    rows = -(-n // k)                       # ceil(n / k)
    rows = ((rows + 7) // 8) * 8
    n_pad = rows * k

    flat = coords.reshape(-1)
    if n_pad != n:
        flat = jnp.pad(flat, (0, n_pad - n))
    lhs = flat.reshape(rows, k)

    # Block-diagonal expansion weight: W[j, j*dim + d] = inv_full[d].
    eye = jnp.eye(k, dtype=jnp.float32)
    rhs = (eye[:, :, None] * inv_full[None, None, :]).reshape(k, width)

    # Byte-sized row tile (~target_tile_bytes of output per grid step) to
    # amortize per-step overhead; keep >= ~16 grid steps on large arrays for
    # v7x megacore balance, but only when that still leaves >= 1 MiB tiles.
    out_row_bytes = width * out_itemsize
    tile_r = max(8, (target_tile_bytes // out_row_bytes) // 8 * 8)
    steps_cap = (rows // 16) // 8 * 8
    if steps_cap * out_row_bytes >= (1 * 1024 * 1024):
        tile_r = min(tile_r, steps_cap)
    tile_r = min(tile_r, rows)

    grid = (pl.cdiv(rows, tile_r),)

    out2d = pl.pallas_call(
        _rotary_packed_kernel,
        out_shape=jax.ShapeDtypeStruct((rows, width), out_dtype),
        grid=grid,
        in_specs=[
            pl.BlockSpec((tile_r, k), lambda i: (i, 0)),      # positions tile
            pl.BlockSpec((k, width), lambda i: (0, 0)),       # resident weight
        ],
        out_specs=pl.BlockSpec((tile_r, width), lambda i: (i, 0)),
        compiler_params=pltpu.CompilerParams(
            # "parallel" only matters on v7x (2 TCs); no-op on v5e/v6e.
            dimension_semantics=("parallel",),
            vmem_limit_bytes=32 * 1024 * 1024,
        ),
        cost_estimate=pl.CostEstimate(
            flops=int(2 * n_pad * dim),
            transcendentals=0,
            bytes_accessed=int(4 * n_pad + 4 * rhs.size
                               + rows * width * out_itemsize),
        ),
    )(lhs, rhs)

    out_flat = out2d.reshape(n_pad, dim)[:n]
    return out_flat.reshape(*orig_shape, dim)


def make_inv_freq(dim, base_freq=10000.0):
    # matches: 1.0 / base_freq ** (torch.arange(0, dim, 2).float() / dim)
    return 1.0 / (base_freq ** (jnp.arange(0, dim, 2, dtype=jnp.float32) / dim))


def rotary_reference(coordinates, inv_freq, scale=1.0):
    t = jnp.asarray(coordinates, jnp.float32) * scale
    freqs = t[..., None] * jnp.asarray(inv_freq, jnp.float32)
    return jnp.concatenate([freqs, freqs], axis=-1)


if __name__ == "__main__":
    key = jax.random.PRNGKey(0)
    k1, k2, k3 = jax.random.split(key, 3)

    # Case 1: dim=32 (half=16) -> packed path, k=16 positions / 512-lane row,
    # flattened positions padded up to rows*k and sliced back.
    dim, B, S, scale = 32, 2, 8, 2.0
    coords = jax.random.uniform(k1, (B, S), dtype=jnp.float32) * 10.0
    inv_freq = make_inv_freq(dim)                                  # (16,)
    out = jax.block_until_ready(rotary_embedding(coords, inv_freq, scale=scale))
    ref = rotary_reference(coords, inv_freq, scale=scale)
    assert out.shape == (B, S, dim), out.shape
    assert jnp.allclose(out, ref, atol=1e-5, rtol=1e-5), "mismatch (dim=32)"

    # Case 2: dim=128 -> k=4 packing (512-lane rows), no position padding needed.
    dim2, B2, S2 = 128, 2, 16
    coords2 = jax.random.uniform(k2, (B2, S2), dtype=jnp.float32) * 10.0
    inv_freq2 = make_inv_freq(dim2)                                # (64,)
    out2 = jax.block_until_ready(rotary_embedding(coords2, inv_freq2, scale=1.0))
    ref2 = rotary_reference(coords2, inv_freq2, scale=1.0)
    assert out2.shape == (B2, S2, dim2), out2.shape
    assert jnp.allclose(out2, ref2, atol=1e-5, rtol=1e-5), "mismatch (dim=128)"

    # Case 3: dim=96 (does not divide 128) -> k=8 so width=768 (multiple of 128),
    # exercising the generalized packing instead of a masked-store fallback.
    dim3, B3, S3 = 96, 2, 8
    coords3 = jnp.arange(B3 * S3, dtype=jnp.float32).reshape(B3, S3)
    inv_freq3 = make_inv_freq(dim3)                                # (48,)
    out3 = jax.block_until_ready(rotary_embedding(coords3, inv_freq3, scale=0.5))
    ref3 = rotary_reference(coords3, inv_freq3, scale=0.5)
    assert out3.shape == (B3, S3, dim3), out3.shape
    assert jnp.allclose(out3, ref3, atol=1e-5, rtol=1e-5), "mismatch (dim=96)"

    print("KERNEL_OK")
</pallas_src>

<mosaic_0001>
module attributes {stable_mosaic.version = 11 : i64} {
  func.func @_rotary_packed_kernel(%arg0: i32, %arg1: memref<8x16xf32, #tpu.memory_space<vmem>>, %arg2: memref<16x512xf32, #tpu.memory_space<vmem>>, %arg3: memref<8x512xf32, #tpu.memory_space<vmem>>) attributes {dimension_semantics = [#tpu.dimension_semantics<parallel>], iteration_bounds = array<i64: 1>, scalar_prefetch = 0 : i64, scratch_operands = 0 : i64, tpu.core_type = #tpu.core_type<tc>, window_params = [{transform_indices = @transform_0, window_bounds = array<i64: 8, 16>}, {pipeline_mode = #tpu.pipeline_mode<synchronous>, transform_indices = @transform_1, window_bounds = array<i64: 16, 512>}, {transform_indices = @transform_2, window_bounds = array<i64: 8, 512>}]} {
    %c0 = arith.constant 0 : index
    %c0_0 = arith.constant 0 : index
    %0 = vector.load %arg1[%c0, %c0_0] : memref<8x16xf32, #tpu.memory_space<vmem>>, vector<8x16xf32>
    %c0_1 = arith.constant 0 : index
    %c0_2 = arith.constant 0 : index
    %1 = vector.load %arg2[%c0_1, %c0_2] : memref<16x512xf32, #tpu.memory_space<vmem>>, vector<16x512xf32>
    %cst = arith.constant dense<0.000000e+00> : vector<8x512xf32>
    %2 = tpu.matmul %0, %1, %cst {dimension_numbers = #tpu.dot_dimension_numbers<[1], [0], [0], [1], [0, 0, 1, 1], [], []>, precision = #tpu.contract_precision<fp32>} : vector<8x16xf32>, vector<16x512xf32>, vector<8x512xf32> -> vector<8x512xf32>
    %c0_3 = arith.constant 0 : index
    %c0_4 = arith.constant 0 : index
    %3 = vector.load %arg3[%c0_3, %c0_4] : memref<8x512xf32, #tpu.memory_space<vmem>>, vector<8x512xf32>
    tpu.vector_store %arg3[%c0_3, %c0_4], %2 {strides = array<i32>} : memref<8x512xf32, #tpu.memory_space<vmem>>, vector<8x512xf32>,
    return
  }
  func.func @transform_0(%arg0: i32) -> (i32, i32) {
    %c0_i32 = arith.constant 0 : i32
    %c0_i32_0 = arith.constant 0 : i32
    return %arg0, %c0_i32 : i32, i32
  }
  func.func @transform_1(%arg0: i32) -> (i32, i32) {
    %c0_i32 = arith.constant 0 : i32
    %c0_i32_0 = arith.constant 0 : i32
    %c0_i32_1 = arith.constant 0 : i32
    return %c0_i32, %c0_i32_0 : i32, i32
  }
  func.func @transform_2(%arg0: i32) -> (i32, i32) {
    %c0_i32 = arith.constant 0 : i32
    %c0_i32_0 = arith.constant 0 : i32
    return %arg0, %c0_i32 : i32, i32
  }
}

</mosaic_0001>

<llo_original>
// kernel: tpu_custom_call.1
$region0: #{tpu_custom_call.1}
  #allocation0 [shape = 'u32[]', space=smem, size = 0x4, offset = 0x4, fixed_abs, tag = 'smem constant byte address 0x4 - core index']
  #allocation1 [shape = 'u32[144,128]{1,0:T(1,128)}', space=vmem, size = 0x12000, scoped, tag = 'internal scratch']
  %s0 = inlined_call_operand.hbm [shape: f32[8,16], index: 0, kind: input, shape index: {}]
  %s1 = inlined_call_operand.hbm [shape: f32[16,512], index: 1, kind: input, shape index: {}]
  %s2 = inlined_call_operand.hbm [shape: f32[8,512], index: 2, kind: output, shape index: {}]
  %s3 = sld [smem:[#allocation0]]
  $region26: #{tpu_custom_call.1} parent=0
    _
  %s5 = ssub.s32 1, %s3
  %s6 = scalar_select 0, %s5, %s3
  $region1: #{tpu_custom_call.1} parent=0
    #allocation2 [shape = 'u8[4096]{0}', space=vmem, size = 0x1000, scoped, tag = 'input window, operand 0, single buffered']
    #allocation3 [shape = 's32[1]{0}', space=sflag, size = 0x4, scoped, tag = 'scoped memory for tpu_custom_call.1']
    #allocation4 [shape = 's32[1]{0}', space=sflag, size = 0x4, scoped, tag = 'scoped memory for tpu_custom_call.1']
    #allocation5 [shape = 'u8[32768]{0}', space=vmem, size = 0x8000, scoped, tag = 'input window, operand 1, single buffered']
    #allocation6 [shape = 's32[1]{0}', space=sflag, size = 0x4, scoped, tag = 'scoped memory for tpu_custom_call.1']
    #allocation7 [shape = 'u8[16384]{0}', space=vmem, size = 0x4000, scoped, tag = 'output window, operand 0, single buffered']
    %7 = vsyncpa [#allocation3], 0
    %8 = vsyncpa [#allocation6], 0
    %9 = vsyncpa [#allocation4], 0
    // Predicated region
    $region2: #{tpu_custom_call.1} parent=1 // pred_check
      _
    $region3: #{tpu_custom_call.1} parent=1 // pred_check_branch
      %11 = sbr.rel (0) target = $region5
    $region4: #{tpu_custom_call.1} parent=1 // pred_region
      %s13 = ssub.s32 128, 128
      %14 = vsyncadd [#allocation3], %s13
      %s16 = sshll.u32 [#allocation2], 4
      %s17 = int_to_ptr.vmem [resolvable:$true] %s16
      %19 = dma.hbm_to_vmem [thread:$0]  %s0, 128, %s17, [#allocation3]
    $region5: #{tpu_custom_call.1} parent=1 // pred_fallthru
      _
    // Predicated region
    $region6: #{tpu_custom_call.1} parent=1 // pred_check
      _
    $region7: #{tpu_custom_call.1} parent=1 // pred_check_branch
      %21 = sbr.rel (0) target = $region9
    $region8: #{tpu_custom_call.1} parent=1 // pred_region
      %s23 = ssub.s32 1024, 1024
      %24 = vsyncadd [#allocation6], %s23
      %s25 = sshll.u32 [#allocation5], 4
      %s26 = int_to_ptr.vmem [resolvable:$true] %s25
      %31 = dma.hbm_to_vmem [thread:$0]  %s1, 1024, %s26, [#allocation6], 512, 512, 32
    $region9: #{tpu_custom_call.1} parent=1 // pred_fallthru
      _
    // Predicated region
    $region10: #{tpu_custom_call.1} parent=1 // pred_check
      _
    $region11: #{tpu_custom_call.1} parent=1 // pred_check_branch
      %33 = sbr.rel (0) target = $region13
    $region12: #{tpu_custom_call.1} parent=1 // pred_region
      %34 = dma.done [#allocation3], 128
    $region13: #{tpu_custom_call.1} parent=1 // pred_fallthru
      _
    // Predicated region
    $region14: #{tpu_custom_call.1} parent=1 // pred_check
      _
    $region15: #{tpu_custom_call.1} parent=1 // pred_check_branch
      %36 = sbr.rel (0) target = $region17
    $region16: #{tpu_custom_call.1} parent=1 // pred_region
      %37 = dma.done [#allocation6], 1024
    $region17: #{tpu_custom_call.1} parent=1 // pred_fallthru
      _
    %v38 = vld [vmem:[#allocation2] sm:$0xff]
    %v39 = vld [vmem:[#allocation5] sm:$0xff]
    %v40 = vld [vmem:[#allocation5 + $0x8] sm:$0xff]
    %v41 = vld [vmem:[#allocation5 + $0x10] sm:$0xff]
    %v42 = vld [vmem:[#allocation5 + $0x18] sm:$0xff]
    %v43 = vld [vmem:[#allocation5 + $0x20] sm:$0xff]
    %v44 = vld [vmem:[#allocation5 + $0x28] sm:$0xff]
    %v45 = vld [vmem:[#allocation5 + $0x30] sm:$0xff]
    %v46 = vld [vmem:[#allocation5 + $0x38] sm:$0xff]
    %vm47 = vcmask 130048
    %v49 = vsel %vm47, %v38, 0
    %v51 = vand.u32 %v40, 4294901760
    %52 = vmatprep.subr.mxu0 %v51
    %v53 = vand.u32 %v39, 4294901760
    %54 = vmatpush1.msra.mxu0 %v53
    %v55 = vand.u32 %v44, 4294901760
    %56 = vmatprep.subr.mxu0 %v55
    %v57 = vand.u32 %v43, 4294901760
    %58 = vmatpush1.msra.mxu0 %v57
    %59 = vmatprep.subr.mxu0 0.0
    %60 = vmatpush1.msra.mxu0 0.0
    %61 = vmatprep.subr.mxu0 0.0
    %62 = vmatpush1.msra.mxu0 0.0
    %63 = vmatprep.subr.mxu0 0.0
    %64 = vmatpush1.msra.mxu0 0.0
    %65 = vmatprep.subr.mxu0 0.0
    %66 = vmatpush1.msra.mxu0 0.0
    %67 = vmatprep.subr.mxu0 0.0
    %68 = vmatpush1.msra.mxu0 0.0
    %69 = vmatprep.subr.mxu0 0.0
    %70 = vmatpush1.msra.mxu0 0.0
    %71 = vmatprep.subr.mxu0 0.0
    %72 = vmatpush1.msra.mxu0 0.0
    %73 = vmatprep.subr.mxu0 0.0
    %74 = vmatpush1.msra.mxu0 0.0
    %75 = vmatprep.subr.mxu0 0.0
    %76 = vmatpush1.msra.mxu0 0.0
    %77 = vmatprep.subr.mxu0 0.0
    %78 = vmatpush1.msra.mxu0 0.0
    %79 = vmatprep.subr.mxu0 0.0
    %80 = vmatpush1.msra.mxu0 0.0
    %81 = vmatprep.subr.mxu0 0.0
    %82 = vmatpush1.msra.mxu0 0.0
    %83 = vmatprep.subr.mxu0 0.0
    %84 = vmatpush1.msra.mxu0 0.0
    %85 = vmatprep.subr.mxu0 0.0
    %86 = vmatpush1.msra.mxu0 0.0
    %87 = vmatprep.subr.mxu0 0.0
    %88 = vmatpush1.msra.mxu0 0.0
    %89 = vmatprep.subr.mxu0 0.0
    %90 = vmatpush1.msra.mxu0 0.0
    %91 = vmatprep.subr.mxu0 0.0
    %92 = vmatpush1.msra.mxu0 0.0
    %93 = vmatprep.subr.mxu0 0.0
    %94 = vmatpush1.msra.mxu0 0.0
    %95 = vmatprep.subr.mxu0 0.0
    %96 = vmatpush1.msra.mxu0 0.0
    %97 = vmatprep.subr.mxu0 0.0
    %98 = vmatpush1.msra.mxu0 0.0
    %99 = vmatprep.subr.mxu0 0.0
    %100 = vmatpush1.msra.mxu0 0.0
    %101 = vmatprep.subr.mxu0 0.0
    %102 = vmatpush1.msra.mxu0 0.0
    %103 = vmatprep.subr.mxu0 0.0
    %104 = vmatpush1.msra.mxu0 0.0
    %105 = vmatprep.subr.mxu0 0.0
    %106 = vmatpush1.msra.mxu0 0.0
    %107 = vmatprep.subr.mxu0 0.0
    %108 = vmatpush1.msra.mxu0 0.0
    %109 = vmatprep.subr.mxu0 0.0
    %110 = vmatpush1.msra.mxu0 0.0
    %111 = vmatprep.subr.mxu0 0.0
    %112 = vmatpush1.msra.mxu0 0.0
    %113 = vmatprep.subr.mxu0 0.0
    %114 = vmatpush1.msra.mxu0 0.0
    %115 = vmatprep.subr.mxu0 0.0
    %116 = vmatpush1.msra.mxu0 0.0
    %117 = vmatprep.subr.mxu0 0.0
    %118 = vmatpush1.msra.mxu0 0.0
    %119 = vmatprep.mubr.f32.mxu0 0.0
    %v120 = vand.u32 %v49, 4294901760
    %v121 = vsub.f32 %v49, %v120
    %v122 = vand.u32 %v121, 4294901760
    %v123 = vsub.f32 %v121, %v122
    %v124 = vand.u32 %v123, 4294901760
    %125 = vmatmul.mubr.f32.gmra.mrb[0].mxu0 %v124
    %v126 = vpop.f32.mrb[0].mxu0
    %v127 = vadd.f32 0.0, %v126
    %v128 = vpop.f32.mrb[0].mxu0
    %v129 = vadd.f32 0.0, %v128
    %130 = vdwg.mxu0
    %v131 = vand.u32 %v40, 4294901760
    %v132 = vsub.f32 %v40, %v131
    %v133 = vand.u32 %v132, 4294901760
    %v134 = vsub.f32 %v132, %v133
    %v135 = vand.u32 %v134, 4294901760
    %136 = vmatprep.subr.mxu0 %v135
    %v137 = vand.u32 %v39, 4294901760
    %v138 = vsub.f32 %v39, %v137
    %v139 = vand.u32 %v138, 4294901760
    %v140 = vsub.f32 %v138, %v139
    %v141 = vand.u32 %v140, 4294901760
    %142 = vmatpush1.msra.mxu0 %v141
    %v143 = vand.u32 %v44, 4294901760
    %v144 = vsub.f32 %v44, %v143
    %v145 = vand.u32 %v144, 4294901760
    %v146 = vsub.f32 %v144, %v145
    %v147 = vand.u32 %v146, 4294901760
    %148 = vmatprep.subr.mxu0 %v147
    %v149 = vand.u32 %v43, 4294901760
    %v150 = vsub.f32 %v43, %v149
    %v151 = vand.u32 %v150, 4294901760
    %v152 = vsub.f32 %v150, %v151
    %v153 = vand.u32 %v152, 4294901760
    %154 = vmatpush1.msra.mxu0 %v153
    %155 = vmatprep.subr.mxu0 0.0
    %156 = vmatpush1.msra.mxu0 0.0
    %157 = vmatprep.subr.mxu0 0.0
    %158 = vmatpush1.msra.mxu0 0.0
    %159 = vmatprep.subr.mxu0 0.0
    %160 = vmatpush1.msra.mxu0 0.0
    %161 = vmatprep.subr.mxu0 0.0
    %162 = vmatpush1.msra.mxu0 0.0
    %163 = vmatprep.subr.mxu0 0.0
    %164 = vmatpush1.msra.mxu0 0.0
    %165 = vmatprep.subr.mxu0 0.0
    %166 = vmatpush1.msra.mxu0 0.0
    %167 = vmatprep.subr.mxu0 0.0
    %168 = vmatpush1.msra.mxu0 0.0
    %169 = vmatprep.subr.mxu0 0.0
    %170 = vmatpush1.msra.mxu0 0.0
    %171 = vmatprep.subr.mxu0 0.0
    %172 = vmatpush1.msra.mxu0 0.0
    %173 = vmatprep.subr.mxu0 0.0
    %174 = vmatpush1.msra.mxu0 0.0
    %175 = vmatprep.subr.mxu0 0.0
    %176 = vmatpush1.msra.mxu0 0.0
    %177 = vmatprep.subr.mxu0 0.0
    %178 = vmatpush1.msra.mxu0 0.0
    %179 = vmatprep.subr.mxu0 0.0
    %180 = vmatpush1.msra.mxu0 0.0
    %181 = vmatprep.subr.mxu0 0.0
    %182 = vmatpush1.msra.mxu0 0.0
    %183 = vmatprep.subr.mxu0 0.0
    %184 = vmatpush1.msra.mxu0 0.0
    %185 = vmatprep.subr.mxu0 0.0
    %186 = vmatpush1.msra.mxu0 0.0
    %187 = vmatprep.subr.mxu0 0.0
    %188 = vmatpush1.msra.mxu0 0.0
    %189 = vmatprep.subr.mxu0 0.0
    %190 = vmatpush1.msra.mxu0 0.0
    %191 = vmatprep.subr.mxu0 0.0
    %192 = vmatpush1.msra.mxu0 0.0
    %193 = vmatprep.subr.mxu0 0.0
    %194 = vmatpush1.msra.mxu0 0.0
    %195 = vmatprep.subr.mxu0 0.0
    %196 = vmatpush1.msra.mxu0 0.0
    %197 = vmatprep.subr.mxu0 0.0
    %198 = vmatpush1.msra.mxu0 0.0
    %199 = vmatprep.subr.mxu0 0.0
    %200 = vmatpush1.msra.mxu0 0.0
    %201 = vmatprep.subr.mxu0 0.0
    %202 = vmatpush1.msra.mxu0 0.0
    %203 = vmatprep.subr.mxu0 0.0
    %204 = vmatpush1.msra.mxu0 0.0
    %205 = vmatprep.subr.mxu0 0.0
    %206 = vmatpush1.msra.mxu0 0.0
    %207 = vmatprep.subr.mxu0 0.0
    %208 = vmatpush1.msra.mxu0 0.0
    %209 = vmatprep.subr.mxu0 0.0
    %210 = vmatpush1.msra.mxu0 0.0
    %211 = vmatprep.subr.mxu0 0.0
    %212 = vmatpush1.msra.mxu0 0.0
    %213 = vmatprep.subr.mxu0 0.0
    %214 = vmatpush1.msra.mxu0 0.0
    %215 = vmatprep.mubr.f32.mxu0 0.0
    %v216 = vand.u32 %v49, 4294901760
    %217 = vmatmul.mubr.f32.gmra.mrb[0].mxu0 %v216
    %v218 = vpop.f32.mrb[0].mxu0
    %v219 = vadd.f32 %v127, %v218
    %v220 = vpop.f32.mrb[0].mxu0
    %v221 = vadd.f32 %v129, %v220
    %222 = vdwg.mxu0
    %v223 = vand.u32 %v40, 4294901760
    %v224 = vsub.f32 %v40, %v223
    %225 = vmatprep.subr.mxu0 %v224
    %v226 = vand.u32 %v39, 4294901760
    %v227 = vsub.f32 %v39, %v226
    %228 = vmatpush1.msra.mxu0 %v227
    %v229 = vand.u32 %v44, 4294901760
    %v230 = vsub.f32 %v44, %v229
    %231 = vmatprep.subr.mxu0 %v230
    %v232 = vand.u32 %v43, 4294901760
    %v233 = vsub.f32 %v43, %v232
    %234 = vmatpush1.msra.mxu0 %v233
    %235 = vmatprep.subr.mxu0 0.0
    %236 = vmatpush1.msra.mxu0 0.0
    %237 = vmatprep.subr.mxu0 0.0
    %238 = vmatpush1.msra.mxu0 0.0
    %239 = vmatprep.subr.mxu0 0.0
    %240 = vmatpush1.msra.mxu0 0.0
    %241 = vmatprep.subr.mxu0 0.0
    %242 = vmatpush1.msra.mxu0 0.0
    %243 = vmatprep.subr.mxu0 0.0
    %244 = vmatpush1.msra.mxu0 0.0
    %245 = vmatprep.subr.mxu0 0.0
    %246 = vmatpush1.msra.mxu0 0.0
    %247 = vmatprep.subr.mxu0 0.0
    %248 = vmatpush1.msra.mxu0 0.0
    %249 = vmatprep.subr.mxu0 0.0
    %250 = vmatpush1.msra.mxu0 0.0
    %251 = vmatprep.subr.mxu0 0.0
    %252 = vmatpush1.msra.mxu0 0.0
    %253 = vmatprep.subr.mxu0 0.0
    %254 = vmatpush1.msra.mxu0 0.0
    %255 = vmatprep.subr.mxu0 0.0
    %256 = vmatpush1.msra.mxu0 0.0
    %257 = vmatprep.subr.mxu0 0.0
    %258 = vmatpush1.msra.mxu0 0.0
    %259 = vmatprep.subr.mxu0 0.0
    %260 = vmatpush1.msra.mxu0 0.0
    %261 = vmatprep.subr.mxu0 0.0
    %262 = vmatpush1.msra.mxu0 0.0
    %263 = vmatprep.subr.mxu0 0.0
    %264 = vmatpush1.msra.mxu0 0.0
    %265 = vmatprep.subr.mxu0 0.0
    %266 = vmatpush1.msra.mxu0 0.0
    %267 = vmatprep.subr.mxu0 0.0
    %268 = vmatpush1.msra.mxu0 0.0
    %269 = vmatprep.subr.mxu0 0.0
    %270 = vmatpush1.msra.mxu0 0.0
    %271 = vmatprep.subr.mxu0 0.0
    %272 = vmatpush1.msra.mxu0 0.0
    %273 = vmatprep.subr.mxu0 0.0
    %274 = vmatpush1.msra.mxu0 0.0
    %275 = vmatprep.subr.mxu0 0.0
    %276 = vmatpush1.msra.mxu0 0.0
    %277 = vmatprep.subr.mxu0 0.0
    %278 = vmatpush1.msra.mxu0 0.0
    %279 = vmatprep.subr.mxu0 0.0
    %280 = vmatpush1.msra.mxu0 0.0
    %281 = vmatprep.subr.mxu0 0.0
    %282 = vmatpush1.msra.mxu0 0.0
    %283 = vmatprep.subr.mxu0 0.0
    %284 = vmatpush1.msra.mxu0 0.0
    %285 = vmatprep.subr.mxu0 0.0
    %286 = vmatpush1.msra.mxu0 0.0
    %287 = vmatprep.subr.mxu0 0.0
    %288 = vmatpush1.msra.mxu0 0.0
    %289 = vmatprep.subr.mxu0 0.0
    %290 = vmatpush1.msra.mxu0 0.0
    %291 = vmatprep.subr.mxu0 0.0
    %292 = vmatpush1.msra.mxu0 0.0
    %293 = vmatprep.subr.mxu0 0.0
    %294 = vmatpush1.msra.mxu0 0.0
    %295 = vmatprep.mubr.f32.mxu0 0.0
    %v296 = vand.u32 %v49, 4294901760
    %v297 = vsub.f32 %v49, %v296
    %298 = vmatmul.mubr.f32.gmra.mrb[0].mxu0 %v297
    %v299 = vpop.f32.mrb[0].mxu0
    %v300 = vadd.f32 %v219, %v299
    %v301 = vpop.f32.mrb[0].mxu0
    %v302 = vadd.f32 %v221, %v301
    %303 = vdwg.mxu0
    %v304 = vand.u32 %v40, 4294901760
    %305 = vmatprep.subr.mxu0 %v304
    %v306 = vand.u32 %v39, 4294901760
    %307 = vmatpush1.msra.mxu0 %v306
    %v308 = vand.u32 %v44, 4294901760
    %309 = vmatprep.subr.mxu0 %v308
    %v310 = vand.u32 %v43, 4294901760
    %311 = vmatpush1.msra.mxu0 %v310
    %312 = vmatprep.subr.mxu0 0.0
    %313 = vmatpush1.msra.mxu0 0.0
    %314 = vmatprep.subr.mxu0 0.0
    %315 = vmatpush1.msra.mxu0 0.0
    %316 = vmatprep.subr.mxu0 0.0
    %317 = vmatpush1.msra.mxu0 0.0
    %318 = vmatprep.subr.mxu0 0.0
    %319 = vmatpush1.msra.mxu0 0.0
    %320 = vmatprep.subr.mxu0 0.0
    %321 = vmatpush1.msra.mxu0 0.0
    %322 = vmatprep.subr.mxu0 0.0
    %323 = vmatpush1.msra.mxu0 0.0
    %324 = vmatprep.subr.mxu0 0.0
    %325 = vmatpush1.msra.mxu0 0.0
    %326 = vmatprep.subr.mxu0 0.0
    %327 = vmatpush1.msra.mxu0 0.0
    %328 = vmatprep.subr.mxu0 0.0
    %329 = vmatpush1.msra.mxu0 0.0
    %330 = vmatprep.subr.mxu0 0.0
    %331 = vmatpush1.msra.mxu0 0.0
    %332 = vmatprep.subr.mxu0 0.0
    %333 = vmatpush1.msra.mxu0 0.0
    %334 = vmatprep.subr.mxu0 0.0
    %335 = vmatpush1.msra.mxu0 0.0
    %336 = vmatprep.subr.mxu0 0.0
    %337 = vmatpush1.msra.mxu0 0.0
    %338 = vmatprep.subr.mxu0 0.0
    %339 = vmatpush1.msra.mxu0 0.0
    %340 = vmatprep.subr.mxu0 0.0
    %341 = vmatpush1.msra.mxu0 0.0
    %342 = vmatprep.subr.mxu0 0.0
    %343 = vmatpush1.msra.mxu0 0.0
    %344 = vmatprep.subr.mxu0 0.0
    %345 = vmatpush1.msra.mxu0 0.0
    %346 = vmatprep.subr.mxu0 0.0
    %347 = vmatpush1.msra.mxu0 0.0
    %348 = vmatprep.subr.mxu0 0.0
    %349 = vmatpush1.msra.mxu0 0.0
    %350 = vmatprep.subr.mxu0 0.0
    %351 = vmatpush1.msra.mxu0 0.0
    %352 = vmatprep.subr.mxu0 0.0
    %353 = vmatpush1.msra.mxu0 0.0
    %354 = vmatprep.subr.mxu0 0.0
    %355 = vmatpush1.msra.mxu0 0.0
    %356 = vmatprep.subr.mxu0 0.0
    %357 = vmatpush1.msra.mxu0 0.0
    %358 = vmatprep.subr.mxu0 0.0
    %359 = vmatpush1.msra.mxu0 0.0
    %360 = vmatprep.subr.mxu0 0.0
    %361 = vmatpush1.msra.mxu0 0.0
    %362 = vmatprep.subr.mxu0 0.0
    %363 = vmatpush1.msra.mxu0 0.0
    %364 = vmatprep.subr.mxu0 0.0
    %365 = vmatpush1.msra.mxu0 0.0
    %366 = vmatprep.subr.mxu0 0.0
    %367 = vmatpush1.msra.mxu0 0.0
    %368 = vmatprep.subr.mxu0 0.0
    %369 = vmatpush1.msra.mxu0 0.0
    %370 = vmatprep.subr.mxu0 0.0
    %371 = vmatpush1.msra.mxu0 0.0
    %372 = vmatprep.mubr.f32.mxu0 0.0
    %v373 = vand.u32 %v49, 4294901760
    %v374 = vsub.f32 %v49, %v373
    %v375 = vand.u32 %v374, 4294901760
    %376 = vmatmul.mubr.f32.gmra.mrb[0].mxu0 %v375
    %v377 = vpop.f32.mrb[0].mxu0
    %v378 = vadd.f32 %v300, %v377
    %v379 = vpop.f32.mrb[0].mxu0
    %v380 = vadd.f32 %v302, %v379
    %381 = vdwg.mxu0
    %v382 = vand.u32 %v40, 4294901760
    %v383 = vsub.f32 %v40, %v382
    %v384 = vand.u32 %v383, 4294901760
    %385 = vmatprep.subr.mxu0 %v384
    %v386 = vand.u32 %v39, 4294901760
    %v387 = vsub.f32 %v39, %v386
    %v388 = vand.u32 %v387, 4294901760
    %389 = vmatpush1.msra.mxu0 %v388
    %v390 = vand.u32 %v44, 4294901760
    %v391 = vsub.f32 %v44, %v390
    %v392 = vand.u32 %v391, 4294901760
    %393 = vmatprep.subr.mxu0 %v392
    %v394 = vand.u32 %v43, 4294901760
    %v395 = vsub.f32 %v43, %v394
    %v396 = vand.u32 %v395, 4294901760
    %397 = vmatpush1.msra.mxu0 %v396
    %398 = vmatprep.subr.mxu0 0.0
    %399 = vmatpush1.msra.mxu0 0.0
    %400 = vmatprep.subr.mxu0 0.0
    %401 = vmatpush1.msra.mxu0 0.0
    %402 = vmatprep.subr.mxu0 0.0
    %403 = vmatpush1.msra.mxu0 0.0
    %404 = vmatprep.subr.mxu0 0.0
    %405 = vmatpush1.msra.mxu0 0.0
    %406 = vmatprep.subr.mxu0 0.0
    %407 = vmatpush1.msra.mxu0 0.0
    %408 = vmatprep.subr.mxu0 0.0
    %409 = vmatpush1.msra.mxu0 0.0
    %410 = vmatprep.subr.mxu0 0.0
    %411 = vmatpush1.msra.mxu0 0.0
    %412 = vmatprep.subr.mxu0 0.0
    %413 = vmatpush1.msra.mxu0 0.0
    %414 = vmatprep.subr.mxu0 0.0
    %415 = vmatpush1.msra.mxu0 0.0
    %416 = vmatprep.subr.mxu0 0.0
    %417 = vmatpush1.msra.mxu0 0.0
    %418 = vmatprep.subr.mxu0 0.0
    %419 = vmatpush1.msra.mxu0 0.0
    %420 = vmatprep.subr.mxu0 0.0
    %421 = vmatpush1.msra.mxu0 0.0
    %422 = vmatprep.subr.mxu0 0.0
    %423 = vmatpush1.msra.mxu0 0.0
    %424 = vmatprep.subr.mxu0 0.0
    %425 = vmatpush1.msra.mxu0 0.0
    %426 = vmatprep.subr.mxu0 0.0
    %427 = vmatpush1.msra.mxu0 0.0
    %428 = vmatprep.subr.mxu0 0.0
    %429 = vmatpush1.msra.mxu0 0.0
    %430 = vmatprep.subr.mxu0 0.0
    %431 = vmatpush1.msra.mxu0 0.0
    %432 = vmatprep.subr.mxu0 0.0
    %433 = vmatpush1.msra.mxu0 0.0
    %434 = vmatprep.subr.mxu0 0.0
    %435 = vmatpush1.msra.mxu0 0.0
    %436 = vmatprep.subr.mxu0 0.0
    %437 = vmatpush1.msra.mxu0 0.0
    %438 = vmatprep.subr.mxu0 0.0
    %439 = vmatpush1.msra.mxu0 0.0
    %440 = vmatprep.subr.mxu0 0.0
    %441 = vmatpush1.msra.mxu0 0.0
    %442 = vmatprep.subr.mxu0 0.0
    %443 = vmatpush1.msra.mxu0 0.0
    %444 = vmatprep.subr.mxu0 0.0
    %445 = vmatpush1.msra.mxu0 0.0
    %446 = vmatprep.subr.mxu0 0.0
    %447 = vmatpush1.msra.mxu0 0.0
    %448 = vmatprep.subr.mxu0 0.0
    %449 = vmatpush1.msra.mxu0 0.0
    %450 = vmatprep.subr.mxu0 0.0
    %451 = vmatpush1.msra.mxu0 0.0
    %452 = vmatprep.subr.mxu0 0.0
    %453 = vmatpush1.msra.mxu0 0.0
    %454 = vmatprep.subr.mxu0 0.0
    %455 = vmatpush1.msra.mxu0 0.0
    %456 = vmatprep.subr.mxu0 0.0
    %457 = vmatpush1.msra.mxu0 0.0
    %458 = vmatprep.mubr.f32.mxu0 0.0
    %v459 = vand.u32 %v49, 4294901760
    %460 = vmatmul.mubr.f32.gmra.mrb[0].mxu0 %v459
    %v461 = vpop.f32.mrb[0].mxu0
    %v462 = vadd.f32 %v378, %v461
    %v463 = vpop.f32.mrb[0].mxu0
    %v464 = vadd.f32 %v380, %v463
    %465 = vdwg.mxu0
    %v466 = vand.u32 %v40, 4294901760
    %467 = vmatprep.subr.mxu0 %v466
    %v468 = vand.u32 %v39, 4294901760
    %469 = vmatpush1.msra.mxu0 %v468
    %v470 = vand.u32 %v44, 4294901760
    %471 = vmatprep.subr.mxu0 %v470
    %v472 = vand.u32 %v43, 4294901760
    %473 = vmatpush1.msra.mxu0 %v472
    %474 = vmatprep.subr.mxu0 0.0
    %475 = vmatpush1.msra.mxu0 0.0
    %476 = vmatprep.subr.mxu0 0.0
    %477 = vmatpush1.msra.mxu0 0.0
    %478 = vmatprep.subr.mxu0 0.0
    %479 = vmatpush1.msra.mxu0 0.0
    %480 = vmatprep.subr.mxu0 0.0
    %481 = vmatpush1.msra.mxu0 0.0
    %482 = vmatprep.subr.mxu0 0.0
    %483 = vmatpush1.msra.mxu0 0.0
    %484 = vmatprep.subr.mxu0 0.0
    %485 = vmatpush1.msra.mxu0 0.0
    %486 = vmatprep.subr.mxu0 0.0
    %487 = vmatpush1.msra.mxu0 0.0
    %488 = vmatprep.subr.mxu0 0.0
    %489 = vmatpush1.msra.mxu0 0.0
    %490 = vmatprep.subr.mxu0 0.0
    %491 = vmatpush1.msra.mxu0 0.0
    %492 = vmatprep.subr.mxu0 0.0
    %493 = vmatpush1.msra.mxu0 0.0
    %494 = vmatprep.subr.mxu0 0.0
    %495 = vmatpush1.msra.mxu0 0.0
    %496 = vmatprep.subr.mxu0 0.0
    %497 = vmatpush1.msra.mxu0 0.0
    %498 = vmatprep.subr.mxu0 0.0
    %499 = vmatpush1.msra.mxu0 0.0
    %500 = vmatprep.subr.mxu0 0.0
    %501 = vmatpush1.msra.mxu0 0.0
    %502 = vmatprep.subr.mxu0 0.0
    %503 = vmatpush1.msra.mxu0 0.0
    %504 = vmatprep.subr.mxu0 0.0
    %505 = vmatpush1.msra.mxu0 0.0
    %506 = vmatprep.subr.mxu0 0.0
    %507 = vmatpush1.msra.mxu0 0.0
    %508 = vmatprep.subr.mxu0 0.0
    %509 = vmatpush1.msra.mxu0 0.0
    %510 = vmatprep.subr.mxu0 0.0
    %511 = vmatpush1.msra.mxu0 0.0
    %512 = vmatprep.subr.mxu0 0.0
    %513 = vmatpush1.msra.mxu0 0.0
    %514 = vmatprep.subr.mxu0 0.0
    %515 = vmatpush1.msra.mxu0 0.0
    %516 = vmatprep.subr.mxu0 0.0
    %517 = vmatpush1.msra.mxu0 0.0
    %518 = vmatprep.subr.mxu0 0.0
    %519 = vmatpush1.msra.mxu0 0.0
    %520 = vmatprep.subr.mxu0 0.0
    %521 = vmatpush1.msra.mxu0 0.0
    %522 = vmatprep.subr.mxu0 0.0
    %523 = vmatpush1.msra.mxu0 0.0
    %524 = vmatprep.subr.mxu0 0.0
    %525 = vmatpush1.msra.mxu0 0.0
    %526 = vmatprep.subr.mxu0 0.0
    %527 = vmatpush1.msra.mxu0 0.0
    %528 = vmatprep.subr.mxu0 0.0
    %529 = vmatpush1.msra.mxu0 0.0
    %530 = vmatprep.subr.mxu0 0.0
    %531 = vmatpush1.msra.mxu0 0.0
    %532 = vmatprep.subr.mxu0 0.0
    %533 = vmatpush1.msra.mxu0 0.0
    %534 = vmatprep.mubr.f32.mxu0 0.0
    %v535 = vand.u32 %v49, 4294901760
    %536 = vmatmul.mubr.f32.gmra.mrb[0].mxu0 %v535
    %v537 = vpop.f32.mrb[0].mxu0
    %v538 = vadd.f32 %v462, %v537
    %v539 = vpop.f32.mrb[0].mxu0
    %v540 = vadd.f32 %v464, %v539
    %541 = vdwg.mxu0
    %v542 = vand.u32 %v42, 4294901760
    %543 = vmatprep.subr.mxu0 %v542
    %v544 = vand.u32 %v41, 4294901760
    %545 = vmatpush1.msra.mxu0 %v544
    %v546 = vand.u32 %v46, 4294901760
    %547 = vmatprep.subr.mxu0 %v546
    %v548 = vand.u32 %v45, 4294901760
    %549 = vmatpush1.msra.mxu0 %v548
    %550 = vmatprep.subr.mxu0 0.0
    %551 = vmatpush1.msra.mxu0 0.0
    %552 = vmatprep.subr.mxu0 0.0
    %553 = vmatpush1.msra.mxu0 0.0
    %554 = vmatprep.subr.mxu0 0.0
    %555 = vmatpush1.msra.mxu0 0.0
    %556 = vmatprep.subr.mxu0 0.0
    %557 = vmatpush1.msra.mxu0 0.0
    %558 = vmatprep.subr.mxu0 0.0
    %559 = vmatpush1.msra.mxu0 0.0
    %560 = vmatprep.subr.mxu0 0.0
    %561 = vmatpush1.msra.mxu0 0.0
    %562 = vmatprep.subr.mxu0 0.0
    %563 = vmatpush1.msra.mxu0 0.0
    %564 = vmatprep.subr.mxu0 0.0
    %565 = vmatpush1.msra.mxu0 0.0
    %566 = vmatprep.subr.mxu0 0.0
    %567 = vmatpush1.msra.mxu0 0.0
    %568 = vmatprep.subr.mxu0 0.0
    %569 = vmatpush1.msra.mxu0 0.0
    %570 = vmatprep.subr.mxu0 0.0
    %571 = vmatpush1.msra.mxu0 0.0
    %572 = vmatprep.subr.mxu0 0.0
    %573 = vmatpush1.msra.mxu0 0.0
    %574 = vmatprep.subr.mxu0 0.0
    %575 = vmatpush1.msra.mxu0 0.0
    %576 = vmatprep.subr.mxu0 0.0
    %577 = vmatpush1.msra.mxu0 0.0
    %578 = vmatprep.subr.mxu0 0.0
    %579 = vmatpush1.msra.mxu0 0.0
    %580 = vmatprep.subr.mxu0 0.0
    %581 = vmatpush1.msra.mxu0 0.0
    %582 = vmatprep.subr.mxu0 0.0
    %583 = vmatpush1.msra.mxu0 0.0
    %584 = vmatprep.subr.mxu0 0.0
    %585 = vmatpush1.msra.mxu0 0.0
    %586 = vmatprep.subr.mxu0 0.0
    %587 = vmatpush1.msra.mxu0 0.0
    %588 = vmatprep.subr.mxu0 0.0
    %589 = vmatpush1.msra.mxu0 0.0
    %590 = vmatprep.subr.mxu0 0.0
    %591 = vmatpush1.msra.mxu0 0.0
    %592 = vmatprep.subr.mxu0 0.0
    %593 = vmatpush1.msra.mxu0 0.0
    %594 = vmatprep.subr.mxu0 0.0
    %595 = vmatpush1.msra.mxu0 0.0
    %596 = vmatprep.subr.mxu0 0.0
    %597 = vmatpush1.msra.mxu0 0.0
    %598 = vmatprep.subr.mxu0 0.0
    %599 = vmatpush1.msra.mxu0 0.0
    %600 = vmatprep.subr.mxu0 0.0
    %601 = vmatpush1.msra.mxu0 0.0
    %602 = vmatprep.subr.mxu0 0.0
    %603 = vmatpush1.msra.mxu0 0.0
    %604 = vmatprep.subr.mxu0 0.0
    %605 = vmatpush1.msra.mxu0 0.0
    %606 = vmatprep.subr.mxu0 0.0
    %607 = vmatpush1.msra.mxu0 0.0
    %608 = vmatprep.subr.mxu0 0.0
    %609 = vmatpush1.msra.mxu0 0.0
    %610 = vmatprep.mubr.f32.mxu0 0.0
    %v611 = vand.u32 %v49, 4294901760
    %v612 = vsub.f32 %v49, %v611
    %v613 = vand.u32 %v612, 4294901760
    %v614 = vsub.f32 %v612, %v613
    %v615 = vand.u32 %v614, 4294901760
    %616 = vmatmul.mubr.f32.gmra.mrb[0].mxu0 %v615
    %v617 = vpop.f32.mrb[0].mxu0
    %v618 = vadd.f32 0.0, %v617
    %v619 = vpop.f32.mrb[0].mxu0
    %v620 = vadd.f32 0.0, %v619
    %621 = vdwg.mxu0
    %v622 = vand.u32 %v42, 4294901760
    %v623 = vsub.f32 %v42, %v622
    %v624 = vand.u32 %v623, 4294901760
    %v625 = vsub.f32 %v623, %v624
    %v626 = vand.u32 %v625, 4294901760
    %627 = vmatprep.subr.mxu0 %v626
    %v628 = vand.u32 %v41, 4294901760
    %v629 = vsub.f32 %v41, %v628
    %v630 = vand.u32 %v629, 4294901760
    %v631 = vsub.f32 %v629, %v630
    %v632 = vand.u32 %v631, 4294901760
    %633 = vmatpush1.msra.mxu0 %v632
    %v634 = vand.u32 %v46, 4294901760
    %v635 = vsub.f32 %v46, %v634
    %v636 = vand.u32 %v635, 4294901760
    %v637 = vsub.f32 %v635, %v636
    %v638 = vand.u32 %v637, 4294901760
    %639 = vmatprep.subr.mxu0 %v638
    %v640 = vand.u32 %v45, 4294901760
    %v641 = vsub.f32 %v45, %v640
    %v642 = vand.u32 %v641, 4294901760
    %v643 = vsub.f32 %v641, %v642
    %v644 = vand.u32 %v643, 4294901760
    %645 = vmatpush1.msra.mxu0 %v644
    %646 = vmatprep.subr.mxu0 0.0
    %647 = vmatpush1.msra.mxu0 0.0
    %648 = vmatprep.subr.mxu0 0.0
    %649 = vmatpush1.msra.mxu0 0.0
    %650 = vmatprep.subr.mxu0 0.0
    %651 = vmatpush1.msra.mxu0 0.0
    %652 = vmatprep.subr.mxu0 0.0
    %653 = vmatpush1.msra.mxu0 0.0
    %654 = vmatprep.subr.mxu0 0.0
    %655 = vmatpush1.msra.mxu0 0.0
    %656 = vmatprep.subr.mxu0 0.0
    %657 = vmatpush1.msra.mxu0 0.0
    %658 = vmatprep.subr.mxu0 0.0
    %659 = vmatpush1.msra.mxu0 0.0
    %660 = vmatprep.subr.mxu0 0.0
    %661 = vmatpush1.msra.mxu0 0.0
    %662 = vmatprep.subr.mxu0 0.0
    %663 = vmatpush1.msra.mxu0 0.0
    %664 = vmatprep.subr.mxu0 0.0
    %665 = vmatpush1.msra.mxu0 0.0
    %666 = vmatprep.subr.mxu0 0.0
    %667 = vmatpush1.msra.mxu0 0.0
    %668 = vmatprep.subr.mxu0 0.0
    %669 = vmatpush1.msra.mxu0 0.0
    %670 = vmatprep.subr.mxu0 0.0
    %671 = vmatpush1.msra.mxu0 0.0
    %672 = vmatprep.subr.mxu0 0.0
    %673 = vmatpush1.msra.mxu0 0.0
    %674 = vmatprep.subr.mxu0 0.0
    %675 = vmatpush1.msra.mxu0 0.0
    %676 = vmatprep.subr.mxu0 0.0
    %677 = vmatpush1.msra.mxu0 0.0
    %678 = vmatprep.subr.mxu0 0.0
    %679 = vmatpush1.msra.mxu0 0.0
    %680 = vmatprep.subr.mxu0 0.0
    %681 = vmatpush1.msra.mxu0 0.0
    %682 = vmatprep.subr.mxu0 0.0
    %683 = vmatpush1.msra.mxu0 0.0
    %684 = vmatprep.subr.mxu0 0.0
    %685 = vmatpush1.msra.mxu0 0.0
    %686 = vmatprep.subr.mxu0 0.0
    %687 = vmatpush1.msra.mxu0 0.0
    %688 = vmatprep.subr.mxu0 0.0
    %689 = vmatpush1.msra.mxu0 0.0
    %690 = vmatprep.subr.mxu0 0.0
    %691 = vmatpush1.msra.mxu0 0.0
    %692 = vmatprep.subr.mxu0 0.0
    %693 = vmatpush1.msra.mxu0 0.0
    %694 = vmatprep.subr.mxu0 0.0
    %695 = vmatpush1.msra.mxu0 0.0
    %696 = vmatprep.subr.mxu0 0.0
    %697 = vmatpush1.msra.mxu0 0.0
    %698 = vmatprep.subr.mxu0 0.0
    %699 = vmatpush1.msra.mxu0 0.0
    %700 = vmatprep.subr.mxu0 0.0
    %701 = vmatpush1.msra.mxu0 0.0
    %702 = vmatprep.subr.mxu0 0.0
    %703 = vmatpush1.msra.mxu0 0.0
    %704 = vmatprep.subr.mxu0 0.0
    %705 = vmatpush1.msra.mxu0 0.0
    %706 = vmatprep.mubr.f32.mxu0 0.0
    %v707 = vand.u32 %v49, 4294901760
    %708 = vmatmul.mubr.f32.gmra.mrb[0].mxu0 %v707
    %v709 = vpop.f32.mrb[0].mxu0
    %v710 = vadd.f32 %v618, %v709
    %v711 = vpop.f32.mrb[0].mxu0
    %v712 = vadd.f32 %v620, %v711
    %713 = vdwg.mxu0
    %v714 = vand.u32 %v42, 4294901760
    %v715 = vsub.f32 %v42, %v714
    %716 = vmatprep.subr.mxu0 %v715
    %v717 = vand.u32 %v41, 4294901760
    %v718 = vsub.f32 %v41, %v717
    %719 = vmatpush1.msra.mxu0 %v718
    %v720 = vand.u32 %v46, 4294901760
    %v721 = vsub.f32 %v46, %v720
    %722 = vmatprep.subr.mxu0 %v721
    %v723 = vand.u32 %v45, 4294901760
    %v724 = vsub.f32 %v45, %v723
    %725 = vmatpush1.msra.mxu0 %v724
    %726 = vmatprep.subr.mxu0 0.0
    %727 = vmatpush1.msra.mxu0 0.0
    %728 = vmatprep.subr.mxu0 0.0
    %729 = vmatpush1.msra.mxu0 0.0
    %730 = vmatprep.subr.mxu0 0.0
    %731 = vmatpush1.msra.mxu0 0.0
    %732 = vmatprep.subr.mxu0 0.0
    %733 = vmatpush1.msra.mxu0 0.0
    %734 = vmatprep.subr.mxu0 0.0
    %735 = vmatpush1.msra.mxu0 0.0
    %736 = vmatprep.subr.mxu0 0.0
    %737 = vmatpush1.msra.mxu0 0.0
    %738 = vmatprep.subr.mxu0 0.0
    %739 = vmatpush1.msra.mxu0 0.0
    %740 = vmatprep.subr.mxu0 0.0
    %741 = vmatpush1.msra.mxu0 0.0
    %742 = vmatprep.subr.mxu0 0.0
    %743 = vmatpush1.msra.mxu0 0.0
    %744 = vmatprep.subr.mxu0 0.0
    %745 = vmatpush1.msra.mxu0 0.0
    %746 = vmatprep.subr.mxu0 0.0
    %747 = vmatpush1.msra.mxu0 0.0
    %748 = vmatprep.subr.mxu0 0.0
    %749 = vmatpush1.msra.mxu0 0.0
    %750 = vmatprep.subr.mxu0 0.0
    %751 = vmatpush1.msra.mxu0 0.0
    %752 = vmatprep.subr.mxu0 0.0
    %753 = vmatpush1.msra.mxu0 0.0
    %754 = vmatprep.subr.mxu0 0.0
    %755 = vmatpush1.msra.mxu0 0.0
    %756 = vmatprep.subr.mxu0 0.0
    %757 = vmatpush1.msra.mxu0 0.0
    %758 = vmatprep.subr.mxu0 0.0
    %759 = vmatpush1.msra.mxu0 0.0
    %760 = vmatprep.subr.mxu0 0.0
    %761 = vmatpush1.msra.mxu0 0.0
    %762 = vmatprep.subr.mxu0 0.0
    %763 = vmatpush1.msra.mxu0 0.0
    %764 = vmatprep.subr.mxu0 0.0
    %765 = vmatpush1.msra.mxu0 0.0
    %766 = vmatprep.subr.mxu0 0.0
    %767 = vmatpush1.msra.mxu0 0.0
    %768 = vmatprep.subr.mxu0 0.0
    %769 = vmatpush1.msra.mxu0 0.0
    %770 = vmatprep.subr.mxu0 0.0
    %771 = vmatpush1.msra.mxu0 0.0
    %772 = vmatprep.subr.mxu0 0.0
    %773 = vmatpush1.msra.mxu0 0.0
    %774 = vmatprep.subr.mxu0 0.0
    %775 = vmatpush1.msra.mxu0 0.0
    %776 = vmatprep.subr.mxu0 0.0
    %777 = vmatpush1.msra.mxu0 0.0
    %778 = vmatprep.subr.mxu0 0.0
    %779 = vmatpush1.msra.mxu0 0.0
    %780 = vmatprep.subr.mxu0 0.0
    %781 = vmatpush1.msra.mxu0 0.0
    %782 = vmatprep.subr.mxu0 0.0
    %783 = vmatpush1.msra.mxu0 0.0
    %784 = vmatprep.subr.mxu0 0.0
    %785 = vmatpush1.msra.mxu0 0.0
    %786 = vmatprep.mubr.f32.mxu0 0.0
    %v787 = vand.u32 %v49, 4294901760
    %v788 = vsub.f32 %v49, %v787
    %789 = vmatmul.mubr.f32.gmra.mrb[0].mxu0 %v788
    %v790 = vpop.f32.mrb[0].mxu0
    %v791 = vadd.f32 %v710, %v790
    %v792 = vpop.f32.mrb[0].mxu0
    %v793 = vadd.f32 %v712, %v792
    %794 = vdwg.mxu0
    %v795 = vand.u32 %v42, 4294901760
    %796 = vmatprep.subr.mxu0 %v795
    %v797 = vand.u32 %v41, 4294901760
    %798 = vmatpush1.msra.mxu0 %v797
    %v799 = vand.u32 %v46, 4294901760
    %800 = vmatprep.subr.mxu0 %v799
    %v801 = vand.u32 %v45, 4294901760
    %802 = vmatpush1.msra.mxu0 %v801
    %803 = vmatprep.subr.mxu0 0.0
    %804 = vmatpush1.msra.mxu0 0.0
    %805 = vmatprep.subr.mxu0 0.0
    %806 = vmatpush1.msra.mxu0 0.0
    %807 = vmatprep.subr.mxu0 0.0
    %808 = vmatpush1.msra.mxu0 0.0
    %809 = vmatprep.subr.mxu0 0.0
    %810 = vmatpush1.msra.mxu0 0.0
    %811 = vmatprep.subr.mxu0 0.0
    %812 = vmatpush1.msra.mxu0 0.0
    %813 = vmatprep.subr.mxu0 0.0
    %814 = vmatpush1.msra.mxu0 0.0
    %815 = vmatprep.subr.mxu0 0.0
    %816 = vmatpush1.msra.mxu0 0.0
    %817 = vmatprep.subr.mxu0 0.0
    %818 = vmatpush1.msra.mxu0 0.0
    %819 = vmatprep.subr.mxu0 0.0
    %820 = vmatpush1.msra.mxu0 0.0
    %821 = vmatprep.subr.mxu0 0.0
    %822 = vmatpush1.msra.mxu0 0.0
    %823 = vmatprep.subr.mxu0 0.0
    %824 = vmatpush1.msra.mxu0 0.0
    %825 = vmatprep.subr.mxu0 0.0
    %826 = vmatpush1.msra.mxu0 0.0
    %827 = vmatprep.subr.mxu0 0.0
    %828 = vmatpush1.msra.mxu0 0.0
    %829 = vmatprep.subr.mxu0 0.0
    %830 = vmatpush1.msra.mxu0 0.0
    %831 = vmatprep.subr.mxu0 0.0
    %832 = vmatpush1.msra.mxu0 0.0
    %833 = vmatprep.subr.mxu0 0.0
    %834 = vmatpush1.msra.mxu0 0.0
    %835 = vmatprep.subr.mxu0 0.0
    %836 = vmatpush1.msra.mxu0 0.0
    %837 = vmatprep.subr.mxu0 0.0
    %838 = vmatpush1.msra.mxu0 0.0
    %839 = vmatprep.subr.mxu0 0.0
    %840 = vmatpush1.msra.mxu0 0.0
    %841 = vmatprep.subr.mxu0 0.0
    %842 = vmatpush1.msra.mxu0 0.0
    %843 = vmatprep.subr.mxu0 0.0
    %844 = vmatpush1.msra.mxu0 0.0
    %845 = vmatprep.subr.mxu0 0.0
    %846 = vmatpush1.msra.mxu0 0.0
    %847 = vmatprep.subr.mxu0 0.0
    %848 = vmatpush1.msra.mxu0 0.0
    %849 = vmatprep.subr.mxu0 0.0
    %850 = vmatpush1.msra.mxu0 0.0
    %851 = vmatprep.subr.mxu0 0.0
    %852 = vmatpush1.msra.mxu0 0.0
    %853 = vmatprep.subr.mxu0 0.0
    %854 = vmatpush1.msra.mxu0 0.0
    %855 = vmatprep.subr.mxu0 0.0
    %856 = vmatpush1.msra.mxu0 0.0
    %857 = vmatprep.subr.mxu0 0.0
    %858 = vmatpush1.msra.mxu0 0.0
    %859 = vmatprep.subr.mxu0 0.0
    %860 = vmatpush1.msra.mxu0 0.0
    %861 = vmatprep.subr.mxu0 0.0
    %862 = vmatpush1.msra.mxu0 0.0
    %863 = vmatprep.mubr.f32.mxu0 0.0
    %v864 = vand.u32 %v49, 4294901760
    %v865 = vsub.f32 %v49, %v864
    %v866 = vand.u32 %v865, 4294901760
    %867 = vmatmul.mubr.f32.gmra.mrb[0].mxu0 %v866
    %v868 = vpop.f32.mrb[0].mxu0
    %v869 = vadd.f32 %v791, %v868
    %v870 = vpop.f32.mrb[0].mxu0
    %v871 = vadd.f32 %v793, %v870
    %872 = vdwg.mxu0
    %v873 = vand.u32 %v42, 4294901760
    %v874 = vsub.f32 %v42, %v873
    %v875 = vand.u32 %v874, 4294901760
    %876 = vmatprep.subr.mxu0 %v875
    %v877 = vand.u32 %v41, 4294901760
    %v878 = vsub.f32 %v41, %v877
    %v879 = vand.u32 %v878, 4294901760
    %880 = vmatpush1.msra.mxu0 %v879
    %v881 = vand.u32 %v46, 4294901760
    %v882 = vsub.f32 %v46, %v881
    %v883 = vand.u32 %v882, 4294901760
    %884 = vmatprep.subr.mxu0 %v883
    %v885 = vand.u32 %v45, 4294901760
    %v886 = vsub.f32 %v45, %v885
    %v887 = vand.u32 %v886, 4294901760
    %888 = vmatpush1.msra.mxu0 %v887
    %889 = vmatprep.subr.mxu0 0.0
    %890 = vmatpush1.msra.mxu0 0.0
    %891 = vmatprep.subr.mxu0 0.0
    %892 = vmatpush1.msra.mxu0 0.0
    %893 = vmatprep.subr.mxu0 0.0
    %894 = vmatpush1.msra.mxu0 0.0
    %895 = vmatprep.subr.mxu0 0.0
    %896 = vmatpush1.msra.mxu0 0.0
    %897 = vmatprep.subr.mxu0 0.0
    %898 = vmatpush1.msra.mxu0 0.0
    %899 = vmatprep.subr.mxu0 0.0
    %900 = vmatpush1.msra.mxu0 0.0
    %901 = vmatprep.subr.mxu0 0.0
    %902 = vmatpush1.msra.mxu0 0.0
    %903 = vmatprep.subr.mxu0 0.0
    %904 = vmatpush1.msra.mxu0 0.0
    %905 = vmatprep.subr.mxu0 0.0
    %906 = vmatpush1.msra.mxu0 0.0
    %907 = vmatprep.subr.mxu0 0.0
    %908 = vmatpush1.msra.mxu0 0.0
    %909 = vmatprep.subr.mxu0 0.0
    %910 = vmatpush1.msra.mxu0 0.0
    %911 = vmatprep.subr.mxu0 0.0
    %912 = vmatpush1.msra.mxu0 0.0
    %913 = vmatprep.subr.mxu0 0.0
    %914 = vmatpush1.msra.mxu0 0.0
    %915 = vmatprep.subr.mxu0 0.0
    %916 = vmatpush1.msra.mxu0 0.0
    %917 = vmatprep.subr.mxu0 0.0
    %918 = vmatpush1.msra.mxu0 0.0
    %919 = vmatprep.subr.mxu0 0.0
    %920 = vmatpush1.msra.mxu0 0.0
    %921 = vmatprep.subr.mxu0 0.0
    %922 = vmatpush1.msra.mxu0 0.0
    %923 = vmatprep.subr.mxu0 0.0
    %924 = vmatpush1.msra.mxu0 0.0
    %925 = vmatprep.subr.mxu0 0.0
    %926 = vmatpush1.msra.mxu0 0.0
    %927 = vmatprep.subr.mxu0 0.0
    %928 = vmatpush1.msra.mxu0 0.0
    %929 = vmatprep.subr.mxu0 0.0
    %930 = vmatpush1.msra.mxu0 0.0
    %931 = vmatprep.subr.mxu0 0.0
    %932 = vmatpush1.msra.mxu0 0.0
    %933 = vmatprep.subr.mxu0 0.0
    %934 = vmatpush1.msra.mxu0 0.0
    %935 = vmatprep.subr.mxu0 0.0
    %936 = vmatpush1.msra.mxu0 0.0
    %937 = vmatprep.subr.mxu0 0.0
    %938 = vmatpush1.msra.mxu0 0.0
    %939 = vmatprep.subr.mxu0 0.0
    %940 = vmatpush1.msra.mxu0 0.0
    %941 = vmatprep.subr.mxu0 0.0
    %942 = vmatpush1.msra.mxu0 0.0
    %943 = vmatprep.subr.mxu0 0.0
    %944 = vmatpush1.msra.mxu0 0.0
    %945 = vmatprep.subr.mxu0 0.0
    %946 = vmatpush1.msra.mxu0 0.0
    %947 = vmatprep.subr.mxu0 0.0
    %948 = vmatpush1.msra.mxu0 0.0
    %949 = vmatprep.mubr.f32.mxu0 0.0
    %v950 = vand.u32 %v49, 4294901760
    %951 = vmatmul.mubr.f32.gmra.mrb[0].mxu0 %v950
    %v952 = vpop.f32.mrb[0].mxu0
    %v953 = vadd.f32 %v869, %v952
    %v954 = vpop.f32.mrb[0].mxu0
    %v955 = vadd.f32 %v871, %v954
    %956 = vdwg.mxu0
    %v957 = vand.u32 %v42, 4294901760
    %958 = vmatprep.subr.mxu0 %v957
    %v959 = vand.u32 %v41, 4294901760
    %960 = vmatpush1.msra.mxu0 %v959
    %v961 = vand.u32 %v46, 4294901760
    %962 = vmatprep.subr.mxu0 %v961
    %v963 = vand.u32 %v45, 4294901760
    %964 = vmatpush1.msra.mxu0 %v963
    %965 = vmatprep.subr.mxu0 0.0
    %966 = vmatpush1.msra.mxu0 0.0
    %967 = vmatprep.subr.mxu0 0.0
    %968 = vmatpush1.msra.mxu0 0.0
    %969 = vmatprep.subr.mxu0 0.0
    %970 = vmatpush1.msra.mxu0 0.0
    %971 = vmatprep.subr.mxu0 0.0
    %972 = vmatpush1.msra.mxu0 0.0
    %973 = vmatprep.subr.mxu0 0.0
    %974 = vmatpush1.msra.mxu0 0.0
    %975 = vmatprep.subr.mxu0 0.0
    %976 = vmatpush1.msra.mxu0 0.0
    %977 = vmatprep.subr.mxu0 0.0
    %978 = vmatpush1.msra.mxu0 0.0
    %979 = vmatprep.subr.mxu0 0.0
    %980 = vmatpush1.msra.mxu0 0.0
    %981 = vmatprep.subr.mxu0 0.0
    %982 = vmatpush1.msra.mxu0 0.0
    %983 = vmatprep.subr.mxu0 0.0
    %984 = vmatpush1.msra.mxu0 0.0
    %985 = vmatprep.subr.mxu0 0.0
    %986 = vmatpush1.msra.mxu0 0.0
    %987 = vmatprep.subr.mxu0 0.0
    %988 = vmatpush1.msra.mxu0 0.0
    %989 = vmatprep.subr.mxu0 0.0
    %990 = vmatpush1.msra.mxu0 0.0
    %991 = vmatprep.subr.mxu0 0.0
    %992 = vmatpush1.msra.mxu0 0.0
    %993 = vmatprep.subr.mxu0 0.0
    %994 = vmatpush1.msra.mxu0 0.0
    %995 = vmatprep.subr.mxu0 0.0
    %996 = vmatpush1.msra.mxu0 0.0
    %997 = vmatprep.subr.mxu0 0.0
    %998 = vmatpush1.msra.mxu0 0.0
    %999 = vmatprep.subr.mxu0 0.0
    %1000 = vmatpush1.msra.mxu0 0.0
    %1001 = vmatprep.subr.mxu0 0.0
    %1002 = vmatpush1.msra.mxu0 0.0
    %1003 = vmatprep.subr.mxu0 0.0
    %1004 = vmatpush1.msra.mxu0 0.0
    %1005 = vmatprep.subr.mxu0 0.0
    %1006 = vmatpush1.msra.mxu0 0.0
    %1007 = vmatprep.subr.mxu0 0.0
    %1008 = vmatpush1.msra.mxu0 0.0
    %1009 = vmatprep.subr.mxu0 0.0
    %1010 = vmatpush1.msra.mxu0 0.0
    %1011 = vmatprep.subr.mxu0 0.0
    %1012 = vmatpush1.msra.mxu0 0.0
    %1013 = vmatprep.subr.mxu0 0.0
    %1014 = vmatpush1.msra.mxu0 0.0
    %1015 = vmatprep.subr.mxu0 0.0
    %1016 = vmatpush1.msra.mxu0 0.0
    %1017 = vmatprep.subr.mxu0 0.0
    %1018 = vmatpush1.msra.mxu0 0.0
    %1019 = vmatprep.subr.mxu0 0.0
    %1020 = vmatpush1.msra.mxu0 0.0
    %1021 = vmatprep.subr.mxu0 0.0
    %1022 = vmatpush1.msra.mxu0 0.0
    %1023 = vmatprep.subr.mxu0 0.0
    %1024 = vmatpush1.msra.mxu0 0.0
    %1025 = vmatprep.mubr.f32.mxu0 0.0
    %v1026 = vand.u32 %v49, 4294901760
    %1027 = vmatmul.mubr.f32.gmra.mrb[0].mxu0 %v1026
    %v1028 = vpop.f32.mrb[0].mxu0
    %v1029 = vadd.f32 %v953, %v1028
    %v1030 = vpop.f32.mrb[0].mxu0
    %v1031 = vadd.f32 %v955, %v1030
    %1032 = vdwg.mxu0
    %1033 = vst [vmem:[#allocation7] sm:$0xff] %v538
    %1034 = vst [vmem:[#allocation7 + $0x8] sm:$0xff] %v540
    %1035 = vst [vmem:[#allocation7 + $0x10] sm:$0xff] %v1029
    %1036 = vst [vmem:[#allocation7 + $0x18] sm:$0xff] %v1031
    // Predicated region
    $region18: #{tpu_custom_call.1} parent=1 // pred_check
      _
    $region19: #{tpu_custom_call.1} parent=1 // pred_check_branch
      %1038 = sbr.rel (0) target = $region21
    $region20: #{tpu_custom_call.1} parent=1 // pred_region
      %s1040 = ssub.s32 512, 512
      %1041 = vsyncadd [#allocation4], %s1040
      %s1043 = sshll.u32 [#allocation7], 4
      %s1044 = int_to_ptr.vmem [resolvable:$true] %s1043
      %1046 = dma.vmem_to_hbm [thread:$0]  %s1044, 512, %s2, [#allocation4]
    $region21: #{tpu_custom_call.1} parent=1 // pred_fallthru
      _
    // Predicated region
    $region22: #{tpu_custom_call.1} parent=1 // pred_check
      _
    $region23: #{tpu_custom_call.1} parent=1 // pred_check_branch
      %1048 = sbr.rel (0) target = $region25
    $region24: #{tpu_custom_call.1} parent=1 // pred_region
      %1049 = dma.done [#allocation4], 512
    $region25: #{tpu_custom_call.1} parent=1 // pred_fallthru
      _
    %1050 = vsyncpa [#allocation3], 1
    %1051 = vsyncpa [#allocation6], 1
    %1052 = vsyncpa [#allocation4], 1

</llo_original>
